<compile_context>
chip_gen: v6e
topology: v6e:2x2x1
jax: 0.10.0
libtpu: 0.0.40
codegen_flags: <defaults>
</compile_context>

<pallas_src>
import functools

import jax
import jax.numpy as jnp
from jax.experimental import pallas as pl
from jax.experimental.pallas import tpu as pltpu

_BIG_NEG = -1e30  # finite "-inf": masked entries underflow exp() to 0 without NaN risk


def _round_up(x, m):
    return (x + m - 1) // m * m


def _clip_loss_kernel(img_ref, txt_ref, scale_ref,          # inputs
                      rowp_ref, cmax_ref, csum_ref,         # outputs
                      row_m, row_l,                         # VMEM scratch
                      *, tm, tn, n, ni, nj, row_pad, col_pad, fold_scale):
    i = pl.program_id(0)          # row tile index    (parallel / megacore axis)
    j = pl.program_id(1)          # column tile index (arbitrary, innermost)

    # ---- per-row-tile init: rowp block + row accumulators live across the j sweep ----
    @pl.when(j == 0)
    def _():
        rowp_ref[...] = jnp.zeros_like(rowp_ref)
        row_m[...] = jnp.full_like(row_m, _BIG_NEG)
        row_l[...] = jnp.zeros_like(row_l)

    # ---- logits tile on the MXU: contract last dims (img @ txt.T), f32 accumulation ----
    s = jax.lax.dot_general(
        img_ref[...], txt_ref[...], (((1,), (1,)), ((), ())),
        preferred_element_type=jnp.float32)                  # (tm, tn) f32
    if not fold_scale:
        s = scale_ref[0, 0] * s                              # exact-parity fallback path

    row0 = i * tm
    col0 = j * tn

    # ---- diagonal contribution: only on tiles whose row/col ranges straddle the diag.
    # Padded diagonal entries (k >= n) are exactly zero (zero-padded operands) -> no mask.
    @pl.when(jnp.logical_and(row0 < col0 + tn, col0 < row0 + tm))
    def _():
        rid = row0 + jax.lax.broadcasted_iota(jnp.int32, (tm, tn), 0)
        cid = col0 + jax.lax.broadcasted_iota(jnp.int32, (tm, tn), 1)
        diag = jnp.sum(jnp.where(rid == cid, s, 0.0))
        rowp_ref[...] = rowp_ref[...] - 2.0 * diag

    # ---- flash-style online row logsumexp, accumulated across the column sweep ----
    def row_update(s_rows):
        m_tile = jnp.max(s_rows, axis=1, keepdims=True)       # (tm, 1)
        m_new = jnp.maximum(row_m[...], m_tile)
        p = jnp.exp(s_rows - m_new)                           # shifted so p <= 1
        row_l[...] = row_l[...] * jnp.exp(row_m[...] - m_new) + jnp.sum(p, axis=1, keepdims=True)
        row_m[...] = m_new

    if col_pad:   # static: only the LAST column tile holds padded columns
        @pl.when(j == nj - 1)
        def _():
            cid = col0 + jax.lax.broadcasted_iota(jnp.int32, (1, tn), 1)
            row_update(jnp.where(cid < n, s, _BIG_NEG))

        @pl.when(j != nj - 1)
        def _():
            row_update(s)
    else:
        row_update(s)

    # ---- per-(row-tile, column-tile) column partials, written into the VMEM-resident
    #      (nj, tn) slab; the slab is flushed to HBM once per row tile ----
    def col_emit(s_cols):
        cmax = jnp.max(s_cols, axis=0, keepdims=True)                    # (1, tn)
        csum = jnp.sum(jnp.exp(s_cols - cmax), axis=0, keepdims=True)    # (1, tn)
        cmax_ref[pl.ds(j, 1), :] = cmax
        csum_ref[pl.ds(j, 1), :] = csum

    if row_pad:   # static: only the LAST row tile holds padded rows
        @pl.when(i == ni - 1)
        def _():
            rid = row0 + jax.lax.broadcasted_iota(jnp.int32, (tm, 1), 0)
            col_emit(jnp.where(rid < n, s, _BIG_NEG))

        @pl.when(i != ni - 1)
        def _():
            col_emit(s)
    else:
        col_emit(s)

    # ---- finalize this row tile: add the sum of (valid) row LSEs to the partial ----
    @pl.when(j == nj - 1)
    def _():
        lse = row_m[...] + jnp.log(row_l[...])                 # (tm, 1)
        if row_pad:
            rid = row0 + jax.lax.broadcasted_iota(jnp.int32, (tm, 1), 0)
            lse = jnp.where(rid < n, lse, 0.0)
        rowp_ref[...] = rowp_ref[...] + jnp.sum(lse)


def clip_loss(image_features, text_features, logit_scale, *,
              block_m=None, block_n=None, fold_scale=True):
    """Single-device ClipLoss forward.

    block_m (image row tile, resident) defaults to 1024; block_n (streamed text
    column tile) defaults to 512 on 128-MiB-VMEM parts (v5e/v6e) and 256 on 64-MiB
    parts (v7x).  Tiles are shrunk automatically if the footprint would not fit.
    fold_scale=True folds logit_scale into the image operand (faster; re-rounds the
    scaled operand for sub-f32 inputs); fold_scale=False applies it post-matmul in
    f32 for exact parity with the reference.
    """
    n, d = image_features.shape
    assert text_features.shape == (n, d)

    # Sublane granularity for the input dtype (f32: 8, bf16: 16, int8/fp8: 32).
    itemsize = jnp.dtype(image_features.dtype).itemsize
    sub = 8 if itemsize >= 4 else (16 if itemsize == 2 else 32)
    d_pad = _round_up(d, 128)            # lane-dense feature dim for the MXU

    try:
        vmem_cap = int(pltpu.get_tpu_info().vmem_capacity_bytes)
    except Exception:
        vmem_cap = 128 * 1024 * 1024     # assume v5e/v6e-class if the query fails

    if block_m is None:
        block_m = 1024
    if block_n is None:
        block_n = 512 if vmem_cap >= (100 << 20) else 256

    n_ceil = _round_up(n, sub)
    tm = _round_up(min(block_m, n_ceil), sub)
    tn = _round_up(min(block_n, n_ceil), sub)

    # Rough live-VMEM footprint for (tm, tn); shrink tiles if it would not fit the
    # generation's budget (notably v7x's 64 MiB, or very large feature dims).
    def _footprint(tm_, tn_):
        return (2 * (tm_ + tn_) * d_pad * itemsize   # double-buffered input tiles
                + 8 * tm_ * tn_ * 4                  # live f32 (tm, tn) temporaries
                + 2 * tm_ * 128 * 4                  # row_m / row_l scratch (lane-padded)
                + 4 * _round_up(n, tn_) * 4          # cmax/csum output slabs (x2 buffers)
                + (8 << 20))                         # slack
    while _footprint(tm, tn) > 0.55 * vmem_cap and tm > 256:
        tm = _round_up(tm // 2, sub)
    while _footprint(tm, tn) > 0.55 * vmem_cap and tn > 128:
        tn = _round_up(tn // 2, sub)

    n_pad_m = _round_up(n, tm)
    n_pad_n = _round_up(n, tn)
    ni = n_pad_m // tm
    nj = n_pad_n // tn
    row_pad = (n_pad_m != n)
    col_pad = (n_pad_n != n)

    scale = jnp.asarray(logit_scale, dtype=jnp.float32)
    if fold_scale:
        # O(N*D) fold of the scale into the image operand (kills the per-step O(N^2)
        # VPU multiply).  For bf16 inputs this re-rounds the scaled operand — fine
        # within CLIP tolerances; use fold_scale=False for exact reference parity.
        img = (image_features.astype(jnp.float32) * scale).astype(image_features.dtype)
    else:
        img = image_features
    img = jnp.pad(img, ((0, n_pad_m - n), (0, d_pad - d)))
    txt = jnp.pad(text_features, ((0, n_pad_n - n), (0, d_pad - d)))
    scale_arr = scale.reshape(1, 1)

    vmem_floor = (64 << 20) if vmem_cap >= (100 << 20) else (40 << 20)
    vmem_limit = int(min(0.75 * vmem_cap, max(vmem_floor, _footprint(tm, tn))))

    kernel = functools.partial(
        _clip_loss_kernel, tm=tm, tn=tn, n=n, ni=ni, nj=nj,
        row_pad=row_pad, col_pad=col_pad, fold_scale=fold_scale)

    rowp, cmax, csum = pl.pallas_call(
        kernel,
        out_shape=(
            jax.ShapeDtypeStruct((ni, 1, 1), jnp.float32),    # sum(row lse) - 2*sum(diag) per row tile
            jax.ShapeDtypeStruct((ni, nj, tn), jnp.float32),  # per-tile column max
            jax.ShapeDtypeStruct((ni, nj, tn), jnp.float32),  # per-tile column sumexp
        ),
        grid=(ni, nj),
        in_specs=[
            pl.BlockSpec((tm, d_pad), lambda i, j: (i, 0)),     # image row tile: resident over j
            pl.BlockSpec((tn, d_pad), lambda i, j: (j, 0)),     # text col tile: streamed over j
            pl.BlockSpec(memory_space=pltpu.MemorySpace.SMEM),  # logit_scale (unused if folded)
        ],
        out_specs=(
            pl.BlockSpec((1, 1, 1), lambda i, j: (i, 0, 0)),
            pl.BlockSpec((None, nj, tn), lambda i, j: (i, 0, 0)),  # slab resident over j
            pl.BlockSpec((None, nj, tn), lambda i, j: (i, 0, 0)),  # slab resident over j
        ),
        scratch_shapes=[
            pltpu.VMEM((tm, 1), jnp.float32),   # running row max
            pltpu.VMEM((tm, 1), jnp.float32),   # running row sumexp
        ],
        compiler_params=pltpu.CompilerParams(
            dimension_semantics=("parallel", "arbitrary"),
            vmem_limit_bytes=vmem_limit,
        ),
    )(img, txt, scale_arr)

    # Tiny wrapper-side combine, O(ni * N): merge per-row-tile column stats into the
    # column logsumexp and fold in the row/diag partials.
    pmax = cmax.reshape(ni, n_pad_n)[:, :n]
    psum = csum.reshape(ni, n_pad_n)[:, :n]
    gmax = jnp.max(pmax, axis=0)
    col_lse = gmax + jnp.log(jnp.sum(jnp.exp(pmax - gmax) * psum, axis=0))
    total = jnp.sum(rowp) + jnp.sum(col_lse)
    return total / jnp.float32(2 * n)


def clip_loss_ref(image_features, text_features, logit_scale):
    # Pure-JAX reference (f32) for correctness checking.
    img = image_features.astype(jnp.float32)
    txt = text_features.astype(jnp.float32)
    logits = logit_scale * img @ txt.T
    labels = jnp.arange(logits.shape[0])
    ce_img = -jnp.mean(jax.nn.log_softmax(logits, axis=-1)[labels, labels])
    ce_txt = -jnp.mean(jax.nn.log_softmax(logits.T, axis=-1)[labels, labels])
    return 0.5 * (ce_img + ce_txt)


def _make_pair(key, n, d, dtype):
    k1, k2 = jax.random.split(key)
    img = jax.random.normal(k1, (n, d), dtype=jnp.float32)
    txt = jax.random.normal(k2, (n, d), dtype=jnp.float32)
    img = (img / jnp.linalg.norm(img, axis=-1, keepdims=True)).astype(dtype)
    txt = (txt / jnp.linalg.norm(txt, axis=-1, keepdims=True)).astype(dtype)
    return img, txt


if __name__ == "__main__":
    key = jax.random.PRNGKey(0)
    k1, k2, k3 = jax.random.split(key, 3)
    logit_scale = jnp.float32(1.0 / 0.07)

    # Test 1: small bf16 batch, single tile, exact-parity path (scale applied in-kernel).
    img, txt = _make_pair(k1, 8, 32, jnp.bfloat16)
    loss = clip_loss(img, txt, logit_scale, fold_scale=False)
    jax.block_until_ready(loss)
    ref = clip_loss_ref(img, txt, logit_scale)
    assert jnp.allclose(loss, ref, rtol=2e-3, atol=2e-3), (loss, ref)

    # Test 2: f32, TM != TN, ragged N on both axes (boundary masks + cross-tile diagonal).
    img2, txt2 = _make_pair(k2, 20, 40, jnp.float32)
    loss2 = clip_loss(img2, txt2, logit_scale, block_m=16, block_n=8, fold_scale=True)
    jax.block_until_ready(loss2)
    ref2 = clip_loss_ref(img2, txt2, logit_scale)
    assert jnp.allclose(loss2, ref2, rtol=2e-3, atol=2e-3), (loss2, ref2)

    # Test 3: bf16, TM != TN, ragged, folded-scale fast path (bf16 re-rounding of the
    # scaled operand -> slightly looser tolerance).
    img3, txt3 = _make_pair(k3, 40, 24, jnp.bfloat16)
    loss3 = clip_loss(img3, txt3, logit_scale, block_m=32, block_n=16, fold_scale=True)
    jax.block_until_ready(loss3)
    ref3 = clip_loss_ref(img3, txt3, logit_scale)
    assert jnp.allclose(loss3, ref3, rtol=1e-2, atol=1e-2), (loss3, ref3)

    print("KERNEL_OK")
</pallas_src>

<mosaic_0001>
module attributes {stable_mosaic.version = 11 : i64} {
  func.func @_clip_loss_kernel(%arg0: i32, %arg1: i32, %arg2: memref<16x128xbf16, #tpu.memory_space<vmem>>, %arg3: memref<16x128xbf16, #tpu.memory_space<vmem>>, %arg4: memref<1x1xf32, #tpu.memory_space<smem>>, %arg5: memref<1x1x1xf32, #tpu.memory_space<vmem>>, %arg6: memref<1x1x16xf32, #tpu.memory_space<vmem>>, %arg7: memref<1x1x16xf32, #tpu.memory_space<vmem>>, %arg8: memref<16x1xf32, #tpu.memory_space<vmem>>, %arg9: memref<16x1xf32, #tpu.memory_space<vmem>>) attributes {dimension_semantics = [#tpu.dimension_semantics<parallel>, #tpu.dimension_semantics<arbitrary>], iteration_bounds = array<i64: 1, 1>, scalar_prefetch = 0 : i64, scratch_operands = 2 : i64, tpu.core_type = #tpu.core_type<tc>, window_params = [{transform_indices = @transform_0, window_bounds = array<i64: 16, 128>}, {transform_indices = @transform_1, window_bounds = array<i64: 16, 128>}, {transform_indices = @transform_2, window_bounds = array<i64: 1, 1>}, {transform_indices = @transform_3, window_bounds = array<i64: 1, 1, 1>}, {transform_indices = @transform_4, window_bounds = array<i64: 1, 1, 16>}, {transform_indices = @transform_5, window_bounds = array<i64: 1, 1, 16>}]} {
    %c0_i32 = arith.constant 0 : i32
    %0 = arith.cmpi eq, %arg1, %c0_i32 : i32
    %1 = arith.extui %0 : i1 to i32
    %c0_i32_0 = arith.constant 0 : i32
    %2 = arith.cmpi ne, %1, %c0_i32_0 : i32
    scf.if %2 {
      %cst_20 = arith.constant 0.000000e+00 : f32
      %33 = vector.broadcast %cst_20 : f32 to vector<1x1x1xf32>
      %c0_21 = arith.constant 0 : index
      %c0_22 = arith.constant 0 : index
      %c0_23 = arith.constant 0 : index
      %34 = vector.load %arg5[%c0_21, %c0_22, %c0_23] : memref<1x1x1xf32, #tpu.memory_space<vmem>>, vector<1x1x1xf32>
      tpu.vector_store %arg5[%c0_21, %c0_22, %c0_23], %33 {strides = array<i32>} : memref<1x1x1xf32, #tpu.memory_space<vmem>>, vector<1x1x1xf32>,
      %cst_24 = arith.constant -1.000000e+30 : f32
      %35 = vector.broadcast %cst_24 : f32 to vector<16x1xf32>
      %c0_25 = arith.constant 0 : index
      %c0_26 = arith.constant 0 : index
      %36 = vector.load %arg8[%c0_25, %c0_26] : memref<16x1xf32, #tpu.memory_space<vmem>>, vector<16x1xf32>
      tpu.vector_store %arg8[%c0_25, %c0_26], %35 {strides = array<i32>} : memref<16x1xf32, #tpu.memory_space<vmem>>, vector<16x1xf32>,
      %cst_27 = arith.constant 0.000000e+00 : f32
      %37 = vector.broadcast %cst_27 : f32 to vector<16x1xf32>
      %c0_28 = arith.constant 0 : index
      %c0_29 = arith.constant 0 : index
      %38 = vector.load %arg9[%c0_28, %c0_29] : memref<16x1xf32, #tpu.memory_space<vmem>>, vector<16x1xf32>
      tpu.vector_store %arg9[%c0_28, %c0_29], %37 {strides = array<i32>} : memref<16x1xf32, #tpu.memory_space<vmem>>, vector<16x1xf32>,
    } else {
    }
    %c0 = arith.constant 0 : index
    %c0_1 = arith.constant 0 : index
    %3 = vector.load %arg2[%c0, %c0_1] : memref<16x128xbf16, #tpu.memory_space<vmem>>, vector<16x128xbf16>
    %c0_2 = arith.constant 0 : index
    %c0_3 = arith.constant 0 : index
    %4 = vector.load %arg3[%c0_2, %c0_3] : memref<16x128xbf16, #tpu.memory_space<vmem>>, vector<16x128xbf16>
    %cst = arith.constant dense<0.000000e+00> : vector<16x16xf32>
    %5 = tpu.matmul %3, %4, %cst {dimension_numbers = #tpu.dot_dimension_numbers<[1], [1], [0], [0], [0, 0, 1, 0], [], []>} : vector<16x128xbf16>, vector<16x128xbf16>, vector<16x16xf32> -> vector<16x16xf32>
    %c0_4 = arith.constant 0 : index
    %c0_5 = arith.constant 0 : index
    %6 = memref.load %arg4[%c0_4, %c0_5] : memref<1x1xf32, #tpu.memory_space<smem>>
    %7 = vector.broadcast %6 : f32 to vector<16x16xf32>
    %8 = arith.mulf %7, %5 : vector<16x16xf32>
    %c16_i32 = arith.constant 16 : i32
    %9 = arith.muli %arg0, %c16_i32 : i32
    %c16_i32_6 = arith.constant 16 : i32
    %10 = arith.muli %arg1, %c16_i32_6 : i32
    %c16_i32_7 = arith.constant 16 : i32
    %11 = arith.addi %10, %c16_i32_7 : i32
    %12 = arith.cmpi slt, %9, %11 : i32
    %c16_i32_8 = arith.constant 16 : i32
    %13 = arith.addi %9, %c16_i32_8 : i32
    %14 = arith.cmpi slt, %10, %13 : i32
    %15 = arith.andi %12, %14 : i1
    %16 = arith.extui %15 : i1 to i32
    %c0_i32_9 = arith.constant 0 : i32
    %17 = arith.cmpi ne, %16, %c0_i32_9 : i32
    scf.if %17 {
      %33 = tpu.iota {dimensions = array<i32: 0>} : vector<16x16xi32>
      %34 = vector.broadcast %9 : i32 to vector<16x16xi32>
      %35 = arith.addi %34, %33 : vector<16x16xi32>
      %36 = tpu.iota {dimensions = array<i32: 1>} : vector<16x16xi32>
      %37 = vector.broadcast %10 : i32 to vector<16x16xi32>
      %38 = arith.addi %37, %36 : vector<16x16xi32>
      %39 = arith.cmpi eq, %35, %38 : vector<16x16xi32>
      %cst_20 = arith.constant 0.000000e+00 : f32
      %40 = vector.broadcast %cst_20 : f32 to vector<16x16xf32>
      %41 = arith.select %39, %8, %40 : vector<16x16xi1>, vector<16x16xf32>
      %42 = vector.shape_cast %41 : vector<16x16xf32> to vector<1x16x16xf32>
      %cst_21 = arith.constant dense<0.000000e+00> : vector<1xf32>
      %43 = vector.multi_reduction <add>, %42, %cst_21 [1, 2] : vector<1x16x16xf32> to vector<1xf32>
      %44 = vector.shape_cast %43 : vector<1xf32> to vector<1x1x1xf32>
      %45 = vector.extract %44[0, 0, 0] : f32 from vector<1x1x1xf32>
      %c0_22 = arith.constant 0 : index
      %c0_23 = arith.constant 0 : index
      %c0_24 = arith.constant 0 : index
      %46 = vector.load %arg5[%c0_22, %c0_23, %c0_24] : memref<1x1x1xf32, #tpu.memory_space<vmem>>, vector<1x1x1xf32>
      %cst_25 = arith.constant 2.000000e+00 : f32
      %47 = arith.mulf %cst_25, %45 : f32
      %48 = vector.broadcast %47 : f32 to vector<1x1x1xf32>
      %49 = arith.subf %46, %48 : vector<1x1x1xf32>
      %c0_26 = arith.constant 0 : index
      %c0_27 = arith.constant 0 : index
      %c0_28 = arith.constant 0 : index
      %50 = vector.load %arg5[%c0_26, %c0_27, %c0_28] : memref<1x1x1xf32, #tpu.memory_space<vmem>>, vector<1x1x1xf32>
      tpu.vector_store %arg5[%c0_26, %c0_27, %c0_28], %49 {strides = array<i32>} : memref<1x1x1xf32, #tpu.memory_space<vmem>>, vector<1x1x1xf32>,
    } else {
    }
    %c0_i32_10 = arith.constant 0 : i32
    %18 = arith.cmpi eq, %arg1, %c0_i32_10 : i32
    %19 = arith.extui %18 : i1 to i32
    %c0_i32_11 = arith.constant 0 : i32
    %20 = arith.cmpi ne, %19, %c0_i32_11 : i32
    scf.if %20 {
      %33 = tpu.iota {dimensions = array<i32: 1>} : vector<1x16xi32>
      %34 = vector.broadcast %10 : i32 to vector<1x16xi32>
      %35 = arith.addi %34, %33 : vector<1x16xi32>
      %c8_i32 = arith.constant 8 : i32
      %36 = vector.broadcast %c8_i32 : i32 to vector<1x16xi32>
      %37 = arith.cmpi slt, %35, %36 : vector<1x16xi32>
      %cst_20 = arith.constant -1.000000e+30 : f32
      %38 = vector.shape_cast %37 : vector<1x16xi1> to vector<1x16xi1>
      %39 = vector.broadcast %38 : vector<1x16xi1> to vector<16x16xi1>
      %40 = vector.broadcast %cst_20 : f32 to vector<16x16xf32>
      %41 = arith.select %39, %8, %40 : vector<16x16xi1>, vector<16x16xf32>
      %cst_21 = arith.constant dense<0xFF800000> : vector<16xf32>
      %42 = vector.multi_reduction <maximumf>, %41, %cst_21 [1] : vector<16x16xf32> to vector<16xf32>
      %43 = vector.shape_cast %42 : vector<16xf32> to vector<16x1xf32>
      %c0_22 = arith.constant 0 : index
      %c0_23 = arith.constant 0 : index
      %44 = vector.load %arg8[%c0_22, %c0_23] : memref<16x1xf32, #tpu.memory_space<vmem>>, vector<16x1xf32>
      %45 = arith.maximumf %44, %43 : vector<16x1xf32>
      %46 = vector.broadcast %45 : vector<16x1xf32> to vector<16x16xf32>
      %47 = arith.subf %41, %46 : vector<16x16xf32>
      %48 = math.exp %47 : vector<16x16xf32>
      %c0_24 = arith.constant 0 : index
      %c0_25 = arith.constant 0 : index
      %49 = vector.load %arg9[%c0_24, %c0_25] : memref<16x1xf32, #tpu.memory_space<vmem>>, vector<16x1xf32>
      %c0_26 = arith.constant 0 : index
      %c0_27 = arith.constant 0 : index
      %50 = vector.load %arg8[%c0_26, %c0_27] : memref<16x1xf32, #tpu.memory_space<vmem>>, vector<16x1xf32>
      %51 = arith.subf %50, %45 : vector<16x1xf32>
      %52 = math.exp %51 : vector<16x1xf32>
      %53 = arith.mulf %49, %52 : vector<16x1xf32>
      %cst_28 = arith.constant dense<0.000000e+00> : vector<16xf32>
      %54 = vector.multi_reduction <add>, %48, %cst_28 [1] : vector<16x16xf32> to vector<16xf32>
      %55 = vector.shape_cast %54 : vector<16xf32> to vector<16x1xf32>
      %56 = arith.addf %53, %55 : vector<16x1xf32>
      %c0_29 = arith.constant 0 : index
      %c0_30 = arith.constant 0 : index
      %57 = vector.load %arg9[%c0_29, %c0_30] : memref<16x1xf32, #tpu.memory_space<vmem>>, vector<16x1xf32>
      tpu.vector_store %arg9[%c0_29, %c0_30], %56 {strides = array<i32>} : memref<16x1xf32, #tpu.memory_space<vmem>>, vector<16x1xf32>,
      %c0_31 = arith.constant 0 : index
      %c0_32 = arith.constant 0 : index
      %58 = vector.load %arg8[%c0_31, %c0_32] : memref<16x1xf32, #tpu.memory_space<vmem>>, vector<16x1xf32>
      tpu.vector_store %arg8[%c0_31, %c0_32], %45 {strides = array<i32>} : memref<16x1xf32, #tpu.memory_space<vmem>>, vector<16x1xf32>,
    } else {
    }
    %c0_i32_12 = arith.constant 0 : i32
    %21 = arith.cmpi ne, %arg1, %c0_i32_12 : i32
    %22 = arith.extui %21 : i1 to i32
    %c0_i32_13 = arith.constant 0 : i32
    %23 = arith.cmpi ne, %22, %c0_i32_13 : i32
    scf.if %23 {
      %cst_20 = arith.constant dense<0xFF800000> : vector<16xf32>
      %33 = vector.multi_reduction <maximumf>, %8, %cst_20 [1] : vector<16x16xf32> to vector<16xf32>
      %34 = vector.shape_cast %33 : vector<16xf32> to vector<16x1xf32>
      %c0_21 = arith.constant 0 : index
      %c0_22 = arith.constant 0 : index
      %35 = vector.load %arg8[%c0_21, %c0_22] : memref<16x1xf32, #tpu.memory_space<vmem>>, vector<16x1xf32>
      %36 = arith.maximumf %35, %34 : vector<16x1xf32>
      %37 = vector.broadcast %36 : vector<16x1xf32> to vector<16x16xf32>
      %38 = arith.subf %8, %37 : vector<16x16xf32>
      %39 = math.exp %38 : vector<16x16xf32>
      %c0_23 = arith.constant 0 : index
      %c0_24 = arith.constant 0 : index
      %40 = vector.load %arg9[%c0_23, %c0_24] : memref<16x1xf32, #tpu.memory_space<vmem>>, vector<16x1xf32>
      %c0_25 = arith.constant 0 : index
      %c0_26 = arith.constant 0 : index
      %41 = vector.load %arg8[%c0_25, %c0_26] : memref<16x1xf32, #tpu.memory_space<vmem>>, vector<16x1xf32>
      %42 = arith.subf %41, %36 : vector<16x1xf32>
      %43 = math.exp %42 : vector<16x1xf32>
      %44 = arith.mulf %40, %43 : vector<16x1xf32>
      %cst_27 = arith.constant dense<0.000000e+00> : vector<16xf32>
      %45 = vector.multi_reduction <add>, %39, %cst_27 [1] : vector<16x16xf32> to vector<16xf32>
      %46 = vector.shape_cast %45 : vector<16xf32> to vector<16x1xf32>
      %47 = arith.addf %44, %46 : vector<16x1xf32>
      %c0_28 = arith.constant 0 : index
      %c0_29 = arith.constant 0 : index
      %48 = vector.load %arg9[%c0_28, %c0_29] : memref<16x1xf32, #tpu.memory_space<vmem>>, vector<16x1xf32>
      tpu.vector_store %arg9[%c0_28, %c0_29], %47 {strides = array<i32>} : memref<16x1xf32, #tpu.memory_space<vmem>>, vector<16x1xf32>,
      %c0_30 = arith.constant 0 : index
      %c0_31 = arith.constant 0 : index
      %49 = vector.load %arg8[%c0_30, %c0_31] : memref<16x1xf32, #tpu.memory_space<vmem>>, vector<16x1xf32>
      tpu.vector_store %arg8[%c0_30, %c0_31], %36 {strides = array<i32>} : memref<16x1xf32, #tpu.memory_space<vmem>>, vector<16x1xf32>,
    } else {
    }
    %c0_i32_14 = arith.constant 0 : i32
    %24 = arith.cmpi eq, %arg0, %c0_i32_14 : i32
    %25 = arith.extui %24 : i1 to i32
    %c0_i32_15 = arith.constant 0 : i32
    %26 = arith.cmpi ne, %25, %c0_i32_15 : i32
    scf.if %26 {
      %33 = tpu.iota {dimensions = array<i32: 0>} : vector<16x1xi32>
      %34 = vector.broadcast %9 : i32 to vector<16x1xi32>
      %35 = arith.addi %34, %33 : vector<16x1xi32>
      %c8_i32 = arith.constant 8 : i32
      %36 = vector.broadcast %c8_i32 : i32 to vector<16x1xi32>
      %37 = arith.cmpi slt, %35, %36 : vector<16x1xi32>
      %cst_20 = arith.constant -1.000000e+30 : f32
      %38 = vector.shape_cast %37 : vector<16x1xi1> to vector<16x1xi1>
      %39 = vector.broadcast %38 : vector<16x1xi1> to vector<16x16xi1>
      %40 = vector.broadcast %cst_20 : f32 to vector<16x16xf32>
      %41 = arith.select %39, %8, %40 : vector<16x16xi1>, vector<16x16xf32>
      %cst_21 = arith.constant dense<0xFF800000> : vector<16xf32>
      %42 = vector.multi_reduction <maximumf>, %41, %cst_21 [0] : vector<16x16xf32> to vector<16xf32>
      %43 = vector.shape_cast %42 : vector<16xf32> to vector<1x16xf32>
      %44 = vector.broadcast %43 : vector<1x16xf32> to vector<16x16xf32>
      %45 = arith.subf %41, %44 : vector<16x16xf32>
      %46 = math.exp %45 : vector<16x16xf32>
      %cst_22 = arith.constant dense<0.000000e+00> : vector<16xf32>
      %47 = vector.multi_reduction <add>, %46, %cst_22 [0] : vector<16x16xf32> to vector<16xf32>
      %48 = vector.shape_cast %47 : vector<16xf32> to vector<1x16xf32>
      %c0_23 = arith.constant 0 : index
      %49 = arith.index_cast %arg1 : i32 to index
      %c0_24 = arith.constant 0 : index
      %50 = vector.load %arg6[%c0_23, %49, %c0_24] : memref<1x1x16xf32, #tpu.memory_space<vmem>>, vector<1x1x16xf32>
      %51 = vector.shape_cast %50 : vector<1x1x16xf32> to vector<1x16xf32>
      %52 = vector.shape_cast %43 : vector<1x16xf32> to vector<1x1x16xf32>
      tpu.vector_store %arg6[%c0_23, %49, %c0_24], %52 {strides = array<i32>} : memref<1x1x16xf32, #tpu.memory_space<vmem>>, vector<1x1x16xf32>,
      %c0_25 = arith.constant 0 : index
      %53 = arith.index_cast %arg1 : i32 to index
      %c0_26 = arith.constant 0 : index
      %54 = vector.load %arg7[%c0_25, %53, %c0_26] : memref<1x1x16xf32, #tpu.memory_space<vmem>>, vector<1x1x16xf32>
      %55 = vector.shape_cast %54 : vector<1x1x16xf32> to vector<1x16xf32>
      %56 = vector.shape_cast %48 : vector<1x16xf32> to vector<1x1x16xf32>
      tpu.vector_store %arg7[%c0_25, %53, %c0_26], %56 {strides = array<i32>} : memref<1x1x16xf32, #tpu.memory_space<vmem>>, vector<1x1x16xf32>,
    } else {
    }
    %c0_i32_16 = arith.constant 0 : i32
    %27 = arith.cmpi ne, %arg0, %c0_i32_16 : i32
    %28 = arith.extui %27 : i1 to i32
    %c0_i32_17 = arith.constant 0 : i32
    %29 = arith.cmpi ne, %28, %c0_i32_17 : i32
    scf.if %29 {
      %cst_20 = arith.constant dense<0xFF800000> : vector<16xf32>
      %33 = vector.multi_reduction <maximumf>, %8, %cst_20 [0] : vector<16x16xf32> to vector<16xf32>
      %34 = vector.shape_cast %33 : vector<16xf32> to vector<1x16xf32>
      %35 = vector.broadcast %34 : vector<1x16xf32> to vector<16x16xf32>
      %36 = arith.subf %8, %35 : vector<16x16xf32>
      %37 = math.exp %36 : vector<16x16xf32>
      %cst_21 = arith.constant dense<0.000000e+00> : vector<16xf32>
      %38 = vector.multi_reduction <add>, %37, %cst_21 [0] : vector<16x16xf32> to vector<16xf32>
      %39 = vector.shape_cast %38 : vector<16xf32> to vector<1x16xf32>
      %c0_22 = arith.constant 0 : index
      %40 = arith.index_cast %arg1 : i32 to index
      %c0_23 = arith.constant 0 : index
      %41 = vector.load %arg6[%c0_22, %40, %c0_23] : memref<1x1x16xf32, #tpu.memory_space<vmem>>, vector<1x1x16xf32>
      %42 = vector.shape_cast %41 : vector<1x1x16xf32> to vector<1x16xf32>
      %43 = vector.shape_cast %34 : vector<1x16xf32> to vector<1x1x16xf32>
      tpu.vector_store %arg6[%c0_22, %40, %c0_23], %43 {strides = array<i32>} : memref<1x1x16xf32, #tpu.memory_space<vmem>>, vector<1x1x16xf32>,
      %c0_24 = arith.constant 0 : index
      %44 = arith.index_cast %arg1 : i32 to index
      %c0_25 = arith.constant 0 : index
      %45 = vector.load %arg7[%c0_24, %44, %c0_25] : memref<1x1x16xf32, #tpu.memory_space<vmem>>, vector<1x1x16xf32>
      %46 = vector.shape_cast %45 : vector<1x1x16xf32> to vector<1x16xf32>
      %47 = vector.shape_cast %39 : vector<1x16xf32> to vector<1x1x16xf32>
      tpu.vector_store %arg7[%c0_24, %44, %c0_25], %47 {strides = array<i32>} : memref<1x1x16xf32, #tpu.memory_space<vmem>>, vector<1x1x16xf32>,
    } else {
    }
    %c0_i32_18 = arith.constant 0 : i32
    %30 = arith.cmpi eq, %arg1, %c0_i32_18 : i32
    %31 = arith.extui %30 : i1 to i32
    %c0_i32_19 = arith.constant 0 : i32
    %32 = arith.cmpi ne, %31, %c0_i32_19 : i32
    scf.if %32 {
      %c0_20 = arith.constant 0 : index
      %c0_21 = arith.constant 0 : index
      %33 = vector.load %arg8[%c0_20, %c0_21] : memref<16x1xf32, #tpu.memory_space<vmem>>, vector<16x1xf32>
      %c0_22 = arith.constant 0 : index
      %c0_23 = arith.constant 0 : index
      %34 = vector.load %arg9[%c0_22, %c0_23] : memref<16x1xf32, #tpu.memory_space<vmem>>, vector<16x1xf32>
      %35 = math.log %34 : vector<16x1xf32>
      %36 = arith.addf %33, %35 : vector<16x1xf32>
      %37 = tpu.iota {dimensions = array<i32: 0>} : vector<16x1xi32>
      %38 = vector.broadcast %9 : i32 to vector<16x1xi32>
      %39 = arith.addi %38, %37 : vector<16x1xi32>
      %c8_i32 = arith.constant 8 : i32
      %40 = vector.broadcast %c8_i32 : i32 to vector<16x1xi32>
      %41 = arith.cmpi slt, %39, %40 : vector<16x1xi32>
      %cst_24 = arith.constant 0.000000e+00 : f32
      %42 = vector.broadcast %cst_24 : f32 to vector<16x1xf32>
      %43 = arith.select %41, %36, %42 : vector<16x1xi1>, vector<16x1xf32>
      %c0_25 = arith.constant 0 : index
      %c0_26 = arith.constant 0 : index
      %c0_27 = arith.constant 0 : index
      %44 = vector.load %arg5[%c0_25, %c0_26, %c0_27] : memref<1x1x1xf32, #tpu.memory_space<vmem>>, vector<1x1x1xf32>
      %45 = vector.shape_cast %43 : vector<16x1xf32> to vector<1x16x1xf32>
      %cst_28 = arith.constant dense<0.000000e+00> : vector<1xf32>
      %46 = vector.multi_reduction <add>, %45, %cst_28 [1, 2] : vector<1x16x1xf32> to vector<1xf32>
      %47 = vector.shape_cast %46 : vector<1xf32> to vector<1x1x1xf32>
      %48 = vector.extract %47[0, 0, 0] : f32 from vector<1x1x1xf32>
      %49 = vector.broadcast %48 : f32 to vector<1x1x1xf32>
      %50 = arith.addf %44, %49 : vector<1x1x1xf32>
      %c0_29 = arith.constant 0 : index
      %c0_30 = arith.constant 0 : index
      %c0_31 = arith.constant 0 : index
      %51 = vector.load %arg5[%c0_29, %c0_30, %c0_31] : memref<1x1x1xf32, #tpu.memory_space<vmem>>, vector<1x1x1xf32>
      tpu.vector_store %arg5[%c0_29, %c0_30, %c0_31], %50 {strides = array<i32>} : memref<1x1x1xf32, #tpu.memory_space<vmem>>, vector<1x1x1xf32>,
    } else {
    }
    return
  }
  func.func @transform_0(%arg0: i32, %arg1: i32) -> (i32, i32) {
    %c0_i32 = arith.constant 0 : i32
    %c0_i32_0 = arith.constant 0 : i32
    return %arg0, %c0_i32 : i32, i32
  }
  func.func @transform_1(%arg0: i32, %arg1: i32) -> (i32, i32) {
    %c0_i32 = arith.constant 0 : i32
    %c0_i32_0 = arith.constant 0 : i32
    return %arg1, %c0_i32 : i32, i32
  }
  func.func @transform_2(%arg0: i32, %arg1: i32) -> (i32, i32) {
    %c0_i32 = arith.constant 0 : i32
    %c0_i32_0 = arith.constant 0 : i32
    %c0_i32_1 = arith.constant 0 : i32
    return %c0_i32, %c0_i32_0 : i32, i32
  }
  func.func @transform_3(%arg0: i32, %arg1: i32) -> (i32, i32, i32) {
    %c0_i32 = arith.constant 0 : i32
    %c0_i32_0 = arith.constant 0 : i32
    %c0_i32_1 = arith.constant 0 : i32
    return %arg0, %c0_i32, %c0_i32_0 : i32, i32, i32
  }
  func.func @transform_4(%arg0: i32, %arg1: i32) -> (i32, i32, i32) {
    %c0_i32 = arith.constant 0 : i32
    %c0_i32_0 = arith.constant 0 : i32
    %c0_i32_1 = arith.constant 0 : i32
    return %arg0, %c0_i32, %c0_i32_0 : i32, i32, i32
  }
  func.func @transform_5(%arg0: i32, %arg1: i32) -> (i32, i32, i32) {
    %c0_i32 = arith.constant 0 : i32
    %c0_i32_0 = arith.constant 0 : i32
    %c0_i32_1 = arith.constant 0 : i32
    return %arg0, %c0_i32, %c0_i32_0 : i32, i32, i32
  }
}

</mosaic_0001>

<llo_original>
// kernel: tpu_custom_call.1
$region0: #{tpu_custom_call.1}
  #allocation0 [shape = 'u32[]', space=smem, size = 0x4, offset = 0x4, fixed_abs, tag = 'smem constant byte address 0x4 - core index']
  #allocation1 [shape = 'u32[144,128]{1,0:T(1,128)}', space=vmem, size = 0x12000, scoped, tag = 'internal scratch']
  #allocation2 [shape = 'f32[16,1]{1,0:T(8,128)}', space=vmem, size = 0x2000, scoped, tag = 'scratch operand']
  #allocation3 [shape = 'f32[16,1]{1,0:T(8,128)}', space=vmem, size = 0x2000, scoped, tag = 'scratch operand']
  #allocation4 [shape = 'f32[1,1]{1,0:T(1,128)S(6)}', space=smem, size = 0x200, scoped, tag = 'scoped memory for tpu_custom_call.1']
  %s0 = inlined_call_operand.hbm [shape: bf16[16,128], index: 0, kind: input, shape index: {}]
  %s1 = inlined_call_operand.hbm [shape: bf16[16,128], index: 1, kind: input, shape index: {}]
  %s2 = inlined_call_operand.<no memory space> [shape: f32[1,1], index: 2, kind: input, shape index: {}]
  %s3 = inlined_call_operand.hbm [shape: f32[1,1,1], index: 3, kind: output, shape index: {0}]
  %s4 = inlined_call_operand.hbm [shape: f32[1,1,16], index: 4, kind: output, shape index: {1}]
  %s5 = inlined_call_operand.hbm [shape: f32[1,1,16], index: 5, kind: output, shape index: {2}]
  %6 = xla_tuple %s3, %s4, %s5
  %s7 = sld [smem:[#allocation0]]
  $region74: #{tpu_custom_call.1} parent=0
    _
  %s9 = ssub.s32 1, %s7
  %s10 = scalar_select 0, %s9, %s7
  %11 = sst [smem:[#allocation4]] %s2
  $region1: #{tpu_custom_call.1} parent=0
    #allocation5 [shape = 'u8[4096]{0}', space=vmem, size = 0x1000, scoped, tag = 'input window, operand 0, single buffered']
    #allocation6 [shape = 's32[1]{0}', space=sflag, size = 0x4, scoped, tag = 'scoped memory for tpu_custom_call.1']
    #allocation7 [shape = 's32[1]{0}', space=sflag, size = 0x4, scoped, tag = 'scoped memory for tpu_custom_call.1']
    #allocation8 [shape = 'u8[4096]{0}', space=vmem, size = 0x1000, scoped, tag = 'input window, operand 1, single buffered']
    #allocation9 [shape = 's32[1]{0}', space=sflag, size = 0x4, scoped, tag = 'scoped memory for tpu_custom_call.1']
    #allocation10 [shape = 'u8[512]{0}', space=vmem, size = 0x400, scoped, tag = 'output window, operand 0, single buffered']
    #allocation11 [shape = 'u8[512]{0}', space=vmem, size = 0x400, scoped, tag = 'output window, operand 1, single buffered']
    #allocation12 [shape = 's32[1]{0}', space=sflag, size = 0x4, scoped, tag = 'scoped memory for tpu_custom_call.1']
    #allocation13 [shape = 'u8[512]{0}', space=vmem, size = 0x400, scoped, tag = 'output window, operand 2, single buffered']
    %12 = vsyncpa [#allocation6], 0
    %13 = vsyncpa [#allocation9], 0
    %14 = vsyncpa [#allocation7], 0
    %15 = vsyncpa [#allocation12], 0
    // Predicated region
    $region2: #{tpu_custom_call.1} parent=1 // pred_check
      _
    $region3: #{tpu_custom_call.1} parent=1 // pred_check_branch
      %17 = sbr.rel (0) target = $region5
    $region4: #{tpu_custom_call.1} parent=1 // pred_region
      %s19 = ssub.s32 128, 128
      %20 = vsyncadd [#allocation6], %s19
      %s21 = sshll.u32 [#allocation5], 4
      %s22 = int_to_ptr.vmem [resolvable:$true] %s21
      %27 = dma.hbm_to_vmem [thread:$0]  %s0, 128, %s22, [#allocation6], 64, 64, 4
    $region5: #{tpu_custom_call.1} parent=1 // pred_fallthru
      _
    // Predicated region
    $region6: #{tpu_custom_call.1} parent=1 // pred_check
      _
    $region7: #{tpu_custom_call.1} parent=1 // pred_check_branch
      %29 = sbr.rel (0) target = $region9
    $region8: #{tpu_custom_call.1} parent=1 // pred_region
      %s31 = ssub.s32 128, 128
      %32 = vsyncadd [#allocation9], %s31
      %s33 = sshll.u32 [#allocation8], 4
      %s34 = int_to_ptr.vmem [resolvable:$true] %s33
      %39 = dma.hbm_to_vmem [thread:$0]  %s1, 128, %s34, [#allocation9], 64, 64, 4
    $region9: #{tpu_custom_call.1} parent=1 // pred_fallthru
      _
    // Predicated region
    $region10: #{tpu_custom_call.1} parent=1 // pred_check
      _
    $region11: #{tpu_custom_call.1} parent=1 // pred_check_branch
      %41 = sbr.rel (0) target = $region13
    $region12: #{tpu_custom_call.1} parent=1 // pred_region
      _
    $region13: #{tpu_custom_call.1} parent=1 // pred_fallthru
      _
    // Predicated region
    $region14: #{tpu_custom_call.1} parent=1 // pred_check
      _
    $region15: #{tpu_custom_call.1} parent=1 // pred_check_branch
      %43 = sbr.rel (0) target = $region17
    $region16: #{tpu_custom_call.1} parent=1 // pred_region
      %44 = dma.done [#allocation6], 128
    $region17: #{tpu_custom_call.1} parent=1 // pred_fallthru
      _
    // Predicated region
    $region18: #{tpu_custom_call.1} parent=1 // pred_check
      _
    $region19: #{tpu_custom_call.1} parent=1 // pred_check_branch
      %46 = sbr.rel (0) target = $region21
    $region20: #{tpu_custom_call.1} parent=1 // pred_region
      %47 = dma.done [#allocation9], 128
    $region21: #{tpu_custom_call.1} parent=1 // pred_fallthru
      _
    %p49 = scmp.eq.s32.totalorder 0, 0
    // Predicated region
    $region22: #{tpu_custom_call.1} parent=1 // pred_check
      %p50 = pneg %p49
    $region23: #{tpu_custom_call.1} parent=1 // pred_check_branch
      %52 = sbr.rel (%p50) target = $region25
    $region24: #{tpu_custom_call.1} parent=1 // pred_region
      %vm53 = vcmask 0
      %54 = vst.msk [vmem:[#allocation10] sm:$0x1] %vm53, 0.0
      %vm55 = vcmask 7168
      %56 = vst.msk [vmem:[#allocation2] sm:$0xff] %vm55, -1e+30
      %57 = vst.msk [vmem:[#allocation2 + $0x8] sm:$0xff] %vm55, -1e+30
      %58 = vst.msk [vmem:[#allocation3] sm:$0xff] %vm55, 0.0
      %59 = vst.msk [vmem:[#allocation3 + $0x8] sm:$0xff] %vm55, 0.0
    $region25: #{tpu_custom_call.1} parent=1 // pred_fallthru
      _
    %v60 = vld [vmem:[#allocation5] sm:$0xf]
    %v61 = vld [vmem:[#allocation5 + $0x4] sm:$0xf]
    %v62 = vld [vmem:[#allocation8] sm:$0xf]
    %v63 = vld [vmem:[#allocation8 + $0x4] sm:$0xf]
    %v66 = vunpack.c.l.b16 %v60
    %v67 = vunpack.c.l.b16 %v61
    %v68 = vpack.c.b16 %v67, %v66
    %v72 = vunpack.c.l.b16 %v62
    %v73 = vunpack.c.l.b16 %v63
    %v74 = vpack.c.b16 %v73, %v72
    %76 = vmatprep.subr.bf16.mxu0 0
    %77 = vmatpush1.bf16.xpose.msra.mxu0 0
    %78 = vmatprep.subr.bf16.mxu0 0
    %79 = vmatpush1.bf16.xpose.msra.mxu0 0
    %80 = vmatprep.subr.bf16.mxu0 0
    %81 = vmatpush1.bf16.xpose.msra.mxu0 0
    %82 = vmatprep.subr.bf16.mxu0 0
    %83 = vmatpush1.bf16.xpose.msra.mxu0 0
    %84 = vmatprep.subr.bf16.mxu0 0
    %85 = vmatpush1.bf16.xpose.msra.mxu0 0
    %86 = vmatprep.subr.bf16.mxu0 0
    %87 = vmatpush1.bf16.xpose.msra.mxu0 0
    %88 = vmatprep.subr.bf16.mxu0 0
    %89 = vmatpush1.bf16.xpose.msra.mxu0 0
    %90 = vmatprep.subr.bf16.mxu0 0
    %91 = vmatpush1.bf16.xpose.msra.mxu0 %v74
    %92 = vmatprep.subr.bf16.mxu0 0
    %93 = vmatpush2.bf16.xpose.msra.mxu0 0
    %94 = vmatprep.subr.bf16.mxu0 0
    %95 = vmatpush2.bf16.xpose.msra.mxu0 0
    %96 = vmatprep.subr.bf16.mxu0 0
    %97 = vmatpush2.bf16.xpose.msra.mxu0 0
    %98 = vmatprep.subr.bf16.mxu0 0
    %99 = vmatpush2.bf16.xpose.msra.mxu0 0
    %100 = vmatprep.subr.bf16.mxu0 0
    %101 = vmatpush2.bf16.xpose.msra.mxu0 0
    %102 = vmatprep.subr.bf16.mxu0 0
    %103 = vmatpush2.bf16.xpose.msra.mxu0 0
    %104 = vmatprep.subr.bf16.mxu0 0
    %105 = vmatpush2.bf16.xpose.msra.mxu0 0
    %106 = vmatprep.subr.bf16.mxu0 0
    %107 = vmatpush2.bf16.xpose.msra.mxu0 0
    %108 = vmatprep.mubr.bf16.mxu0 0
    %109 = vmatmul.mubr.bf16.gmra.mxu0 %v68
    %v110 = vpop.f32.mrf.mxu0
    %v111 = vadd.f32 0.0, %v110
    %v112 = vpop.f32.mrf.mxu0
    %v113 = vpop.f32.mrf.mxu0
    %v114 = vadd.f32 0.0, %v113
    %v115 = vpop.f32.mrf.mxu0
    %116 = vdwg.mxu0
    %s117 = sld [smem:[#allocation4]]
    %v118 = vstv %s117
    %v119 = vmul.f32 %v118, %v111
    %v120 = vmul.f32 %v118, %v114
    %s121 = smul.u32 0, 16
    %s122 = smul.u32 0, 16
    %s123 = sadd.s32 %s122, 16
    %p124 = scmp.lt.s32.totalorder %s121, %s123
    %s125 = sadd.s32 %s121, 16
    %p126 = scmp.lt.s32.totalorder %s122, %s125
    %p127 = pnand %p124, %p126
    %p128 = pneg %p127
    // Predicated region
    $region26: #{tpu_custom_call.1} parent=1 // pred_check
      _
    $region27: #{tpu_custom_call.1} parent=1 // pred_check_branch
      %130 = sbr.rel (%p127) target = $region29
    $region28: #{tpu_custom_call.1} parent=1 // pred_region
      %v131 = vlaneseq
      %v132 = vshrl.u32 %v131, 7
      %v133 = vadd.s32 %v132, 8
      %v134 = vstv %s121
      %v135 = vadd.s32 %v134, %v132
      %v136 = vadd.s32 %v134, %v133
      %v137 = vlaneseq
      %v138 = vand.u32 %v137, 127
      %v139 = vstv %s122
      %v140 = vadd.s32 %v139, %v138
      %vm141 = vcmp.eq.s32.totalorder %v135, %v140
      %vm142 = vcmp.eq.s32.totalorder %v136, %v140
      %v143 = vsel %vm141, %v119, 0.0
      %v144 = vsel %vm142, %v120, 0.0
      %vm145 = vcmask 130048
      %v146 = vsel %vm145, %v143, 0.0
      %v147 = vsel %vm145, %v144, 0.0
      %v148 = vadd.f32 %v146, %v147
      %149 = vadd.xlane.f32.xlu0 %v148
      %v150 = vpop.xlane.xlu0 %149
      %v151 = vrot.slane %v150, 4
      %v152 = vadd.f32 %v150, %v151
      %v153 = vrot.slane %v152, 2
      %v154 = vadd.f32 %v152, %v153
      %v155 = vrot.slane %v154, 1
      %v156 = vadd.f32 %v154, %v155
      %s157 = vtos %v156
      %v158 = vld [vmem:[#allocation10] sm:$0x1]
      %s159 = smul.f32 %s157, 2.0
      %v160 = vstv %s159
      %v161 = vsub.f32 %v158, %v160
      %vm162 = vcmask 0
      %163 = vst.msk [vmem:[#allocation10] sm:$0x1] %vm162, %v161
    $region29: #{tpu_custom_call.1} parent=1 // pred_fallthru
      _
    // Predicated region
    $region30: #{tpu_custom_call.1} parent=1 // pred_check
      %p164 = pneg %p49
    $region31: #{tpu_custom_call.1} parent=1 // pred_check_branch
      %166 = sbr.rel (%p164) target = $region33
    $region32: #{tpu_custom_call.1} parent=1 // pred_region
      %v167 = vlaneseq
      %v168 = vand.u32 %v167, 127
      %v169 = vstv %s122
      %v170 = vadd.s32 %v169, %v168
      %vm171 = vcmp.lt.s32.totalorder %v170, 8
      %v172 = vsel %vm171, 1, 0
      %vm173 = vcmp.eq.s32.totalorder %v172, 1
      %v174 = vsel %vm173, %v119, -1e+30
      %v175 = vsel %vm173, %v120, -1e+30
      %vm176 = vcmask 130048
      %v177 = vsel %vm176, %v174, -inf
      %178 = vmax.xlane.f32.xlu0 %v177
      %v179 = vpop.xlane.xlu0 %178
      %v180 = vsel %vm176, %v175, -inf
      %181 = vmax.xlane.f32.xlu0 %v180
      %v182 = vpop.xlane.xlu0 %181
      %v183 = vld [vmem:[#allocation2] sm:$0xff]
      %v184 = vld [vmem:[#allocation2 + $0x8] sm:$0xff]
      %v185 = vmax.f32 %v183, %v179
      %v186 = vmax.f32 %v184, %v182
      %188 = vset.pattern.permute.xlu0 0
      %189 = vperm.xlu0 %188, %v185
      %v190 = vpop.permute.xlu0 %189
      %193 = vset.pattern.permute.xlu0 0
      %194 = vperm.xlu0 %193, %v186
      %v195 = vpop.permute.xlu0 %194
      %v197 = vsub.f32 %v174, %v190
      %v198 = vsub.f32 %v175, %v195
      %v199 = vmul.f32 %v197, 1.442695
      %v200 = vpow.pop %v199
      %v201 = vmul.f32 %v198, 1.442695
      %v202 = vpow.pop %v201
      %v203 = vld [vmem:[#allocation3] sm:$0xff]
      %v204 = vld [vmem:[#allocation3 + $0x8] sm:$0xff]
      %v205 = vsub.f32 %v183, %v185
      %v206 = vsub.f32 %v184, %v186
      %v207 = vmul.f32 %v205, 1.442695
      %v208 = vpow.pop %v207
      %v209 = vmul.f32 %v206, 1.442695
      %v210 = vpow.pop %v209
      %v211 = vmul.f32 %v203, %v208
      %v212 = vmul.f32 %v204, %v210
      %v213 = vsel %vm176, %v200, 0.0
      %214 = vadd.xlane.f32.xlu0 %v213
      %v215 = vpop.xlane.xlu0 %214
      %v216 = vsel %vm176, %v202, 0.0
      %217 = vadd.xlane.f32.xlu0 %v216
      %v218 = vpop.xlane.xlu0 %217
      %v219 = vadd.f32 %v211, %v215
      %v220 = vadd.f32 %v212, %v218
      %vm221 = vcmask 7168
      %222 = vst.msk [vmem:[#allocation3] sm:$0xff] %vm221, %v219
      %223 = vst.msk [vmem:[#allocation3 + $0x8] sm:$0xff] %vm221, %v220
      %224 = vst.msk [vmem:[#allocation2] sm:$0xff] %vm221, %v185
      %225 = vst.msk [vmem:[#allocation2 + $0x8] sm:$0xff] %vm221, %v186
    $region33: #{tpu_custom_call.1} parent=1 // pred_fallthru
      _
    %p226 = scmp.ne.s32.totalorder 0, 0
    // Predicated region
    $region34: #{tpu_custom_call.1} parent=1 // pred_check
      %p227 = pneg %p226
    $region35: #{tpu_custom_call.1} parent=1 // pred_check_branch
      %229 = sbr.rel (%p227) target = $region37
    $region36: #{tpu_custom_call.1} parent=1 // pred_region
      %vm230 = vcmask 130048
      %v231 = vsel %vm230, %v119, -inf
      %232 = vmax.xlane.f32.xlu0 %v231
      %v233 = vpop.xlane.xlu0 %232
      %v234 = vsel %vm230, %v120, -inf
      %235 = vmax.xlane.f32.xlu0 %v234
      %v236 = vpop.xlane.xlu0 %235
      %v237 = vld [vmem:[#allocation2] sm:$0xff]
      %v238 = vld [vmem:[#allocation2 + $0x8] sm:$0xff]
      %v239 = vmax.f32 %v237, %v233
      %v240 = vmax.f32 %v238, %v236
      %242 = vset.pattern.permute.xlu0 0
      %243 = vperm.xlu0 %242, %v239
      %v244 = vpop.permute.xlu0 %243
      %247 = vset.pattern.permute.xlu0 0
      %248 = vperm.xlu0 %247, %v240
      %v249 = vpop.permute.xlu0 %248
      %v251 = vsub.f32 %v119, %v244
      %v252 = vsub.f32 %v120, %v249
      %v253 = vmul.f32 %v251, 1.442695
      %v254 = vpow.pop %v253
      %v255 = vmul.f32 %v252, 1.442695
      %v256 = vpow.pop %v255
      %v257 = vld [vmem:[#allocation3] sm:$0xff]
      %v258 = vld [vmem:[#allocation3 + $0x8] sm:$0xff]
      %v259 = vsub.f32 %v237, %v239
      %v260 = vsub.f32 %v238, %v240
      %v261 = vmul.f32 %v259, 1.442695
      %v262 = vpow.pop %v261
      %v263 = vmul.f32 %v260, 1.442695
      %v264 = vpow.pop %v263
      %v265 = vmul.f32 %v257, %v262
      %v266 = vmul.f32 %v258, %v264
      %v267 = vsel %vm230, %v254, 0.0
      %268 = vadd.xlane.f32.xlu0 %v267
      %v269 = vpop.xlane.xlu0 %268
      %v270 = vsel %vm230, %v256, 0.0
      %271 = vadd.xlane.f32.xlu0 %v270
      %v272 = vpop.xlane.xlu0 %271
      %v273 = vadd.f32 %v265, %v269
      %v274 = vadd.f32 %v266, %v272
      %vm275 = vcmask 7168
      %276 = vst.msk [vmem:[#allocation3] sm:$0xff] %vm275, %v273
      %277 = vst.msk [vmem:[#allocation3 + $0x8] sm:$0xff] %vm275, %v274
      %278 = vst.msk [vmem:[#allocation2] sm:$0xff] %vm275, %v239
      %279 = vst.msk [vmem:[#allocation2 + $0x8] sm:$0xff] %vm275, %v240
    $region37: #{tpu_custom_call.1} parent=1 // pred_fallthru
      _
    %p280 = scmp.eq.s32.totalorder 0, 0
    // Predicated region
    $region38: #{tpu_custom_call.1} parent=1 // pred_check
      %p281 = pneg %p280
    $region39: #{tpu_custom_call.1} parent=1 // pred_check_branch
      %283 = sbr.rel (%p281) target = $region41
    $region40: #{tpu_custom_call.1} parent=1 // pred_region
      %v284 = vlaneseq
      %v285 = vshrl.u32 %v284, 7
      %v286 = vadd.s32 %v285, 8
      %v287 = vstv %s121
      %v288 = vadd.s32 %v287, %v285
      %v289 = vadd.s32 %v287, %v286
      %vm290 = vcmp.lt.s32.totalorder %v288, 8
      %vm291 = vcmp.lt.s32.totalorder %v289, 8
      %v292 = vsel %vm290, 1, 0
      %v293 = vsel %vm291, 1, 0
      %vm294 = vcmp.eq.s32.totalorder %v292, 1
      %vm295 = vcmp.eq.s32.totalorder %v293, 1
      %v296 = vsel %vm294, %v119, -1e+30
      %v297 = vsel %vm295, %v120, -1e+30
      %vm298 = vcmask 130048
      %v299 = vsel %vm298, %v296, -inf
      %v300 = vsel %vm298, %v297, -inf
      %v301 = vmax.f32 %v299, %v300
      %v302 = vrot.slane %v301, 4
      %v303 = vmax.f32 %v301, %v302
      %v304 = vrot.slane %v303, 2
      %v305 = vmax.f32 %v303, %v304
      %v306 = vrot.slane %v305, 1
      %v307 = vmax.f32 %v305, %v306
      %v308 = vsub.f32 %v296, %v307
      %v309 = vsub.f32 %v297, %v307
      %v310 = vmul.f32 %v308, 1.442695
      %v311 = vpow.pop %v310
      %v312 = vmul.f32 %v309, 1.442695
      %v313 = vpow.pop %v312
      %v314 = vsel %vm298, %v311, 0.0
      %v315 = vsel %vm298, %v313, 0.0
      %v316 = vadd.f32 %v314, %v315
      %v317 = vrot.slane %v316, 4
      %v318 = vadd.f32 %v316, %v317
      %v319 = vrot.slane %v318, 2
      %v320 = vadd.f32 %v318, %v319
      %v321 = vrot.slane %v320, 1
      %v322 = vadd.f32 %v320, %v321
      %vm323 = vcmask 122880
      %324 = vst.msk [vmem:[#allocation11] sm:$0x1] %vm323, %v307
      %325 = vst.msk [vmem:[#allocation13] sm:$0x1] %vm323, %v322
    $region41: #{tpu_custom_call.1} parent=1 // pred_fallthru
      _
    %p326 = scmp.ne.s32.totalorder 0, 0
    // Predicated region
    $region42: #{tpu_custom_call.1} parent=1 // pred_check
      %p327 = pneg %p326
    $region43: #{tpu_custom_call.1} parent=1 // pred_check_branch
      %329 = sbr.rel (%p327) target = $region45
    $region44: #{tpu_custom_call.1} parent=1 // pred_region
      %vm330 = vcmask 130048
      %v331 = vsel %vm330, %v119, -inf
      %v332 = vsel %vm330, %v120, -inf
      %v333 = vmax.f32 %v331, %v332
      %v334 = vrot.slane %v333, 4
      %v335 = vmax.f32 %v333, %v334
      %v336 = vrot.slane %v335, 2
      %v337 = vmax.f32 %v335, %v336
      %v338 = vrot.slane %v337, 1
      %v339 = vmax.f32 %v337, %v338
      %v340 = vsub.f32 %v119, %v339
      %v341 = vsub.f32 %v120, %v339
      %v342 = vmul.f32 %v340, 1.442695
      %v343 = vpow.pop %v342
      %v344 = vmul.f32 %v341, 1.442695
      %v345 = vpow.pop %v344
      %v346 = vsel %vm330, %v343, 0.0
      %v347 = vsel %vm330, %v345, 0.0
      %v348 = vadd.f32 %v346, %v347
      %v349 = vrot.slane %v348, 4
      %v350 = vadd.f32 %v348, %v349
      %v351 = vrot.slane %v350, 2
      %v352 = vadd.f32 %v350, %v351
      %v353 = vrot.slane %v352, 1
      %v354 = vadd.f32 %v352, %v353
      %vm355 = vcmask 122880
      %356 = vst.msk [vmem:[#allocation11] sm:$0x1] %vm355, %v339
      %357 = vst.msk [vmem:[#allocation13] sm:$0x1] %vm355, %v354
    $region45: #{tpu_custom_call.1} parent=1 // pred_fallthru
      _
    // Predicated region
    $region46: #{tpu_custom_call.1} parent=1 // pred_check
      %p358 = pneg %p49
    $region47: #{tpu_custom_call.1} parent=1 // pred_check_branch
      %360 = sbr.rel (%p358) target = $region49
    $region48: #{tpu_custom_call.1} parent=1 // pred_region
      %v361 = vld [vmem:[#allocation2] sm:$0xff]
      %v362 = vld [vmem:[#allocation2 + $0x8] sm:$0xff]
      %v363 = vld [vmem:[#allocation3] sm:$0xff]
      %v364 = vld [vmem:[#allocation3 + $0x8] sm:$0xff]
      %v365 = vlog2.pop %v363
      %v366 = vmul.f32 %v365, 0.6931472
      %v367 = vlog2.pop %v364
      %v368 = vmul.f32 %v367, 0.6931472
      %v369 = vadd.f32 %v361, %v366
      %v370 = vadd.f32 %v362, %v368
      %v371 = vlaneseq
      %v372 = vshrl.u32 %v371, 7
      %v373 = vadd.s32 %v372, 8
      %v374 = vstv %s121
      %v375 = vadd.s32 %v374, %v372
      %v376 = vadd.s32 %v374, %v373
      %vm377 = vcmp.lt.s32.totalorder %v375, 8
      %vm378 = vcmp.lt.s32.totalorder %v376, 8
      %v379 = vsel %vm377, %v369, 0.0
      %v380 = vsel %vm378, %v370, 0.0
      %v381 = vld [vmem:[#allocation10] sm:$0x1]
      %vm382 = vcmask 7168
      %v383 = vsel %vm382, %v379, 0.0
      %v384 = vsel %vm382, %v380, 0.0
      %v385 = vadd.f32 %v383, %v384
      %386 = vadd.xlane.f32.xlu0 %v385
      %v387 = vpop.xlane.xlu0 %386
      %v388 = vrot.slane %v387, 4
      %v389 = vadd.f32 %v387, %v388
      %v390 = vrot.slane %v389, 2
      %v391 = vadd.f32 %v389, %v390
      %v392 = vrot.slane %v391, 1
      %v393 = vadd.f32 %v391, %v392
      %s394 = vtos %v393
      %v395 = vstv %s394
      %v396 = vadd.f32 %v381, %v395
      %vm397 = vcmask 0
      %398 = vst.msk [vmem:[#allocation10] sm:$0x1] %vm397, %v396
    $region49: #{tpu_custom_call.1} parent=1 // pred_fallthru
      _
    // Predicated region
    $region50: #{tpu_custom_call.1} parent=1 // pred_check
      _
    $region51: #{tpu_custom_call.1} parent=1 // pred_check_branch
      %400 = sbr.rel (0) target = $region53
    $region52: #{tpu_custom_call.1} parent=1 // pred_region
      %s402 = ssub.s32 16, 16
      %403 = vsyncadd [#allocation7], %s402
      %s405 = sshll.u32 [#allocation10], 4
      %s406 = int_to_ptr.vmem [resolvable:$true] %s405
      %408 = dma.vmem_to_hbm [thread:$0]  %s406, 16, %s3, [#allocation7]
    $region53: #{tpu_custom_call.1} parent=1 // pred_fallthru
      _
    // Predicated region
    $region54: #{tpu_custom_call.1} parent=1 // pred_check
      _
    $region55: #{tpu_custom_call.1} parent=1 // pred_check_branch
      %410 = sbr.rel (0) target = $region57
    $region56: #{tpu_custom_call.1} parent=1 // pred_region
      %s412 = ssub.s32 16, 16
      %413 = vsyncadd [#allocation12], %s412
      %s415 = sshll.u32 [#allocation11], 4
      %s416 = int_to_ptr.vmem [resolvable:$true] %s415
      %418 = dma.vmem_to_hbm [thread:$0]  %s416, 16, %s4, [#allocation12]
    $region57: #{tpu_custom_call.1} parent=1 // pred_fallthru
      _
    // Predicated region
    $region58: #{tpu_custom_call.1} parent=1 // pred_check
      _
    $region59: #{tpu_custom_call.1} parent=1 // pred_check_branch
      %420 = sbr.rel (0) target = $region61
    $region60: #{tpu_custom_call.1} parent=1 // pred_region
      %s422 = ssub.s32 16, 16
      %423 = vsyncadd [#allocation12], %s422
      %s425 = sshll.u32 [#allocation13], 4
      %s426 = int_to_ptr.vmem [resolvable:$true] %s425
      %428 = dma.vmem_to_hbm [thread:$0]  %s426, 16, %s5, [#allocation12]
    $region61: #{tpu_custom_call.1} parent=1 // pred_fallthru
      _
    // Predicated region
    $region62: #{tpu_custom_call.1} parent=1 // pred_check
      _
    $region63: #{tpu_custom_call.1} parent=1 // pred_check_branch
      %430 = sbr.rel (0) target = $region65
    $region64: #{tpu_custom_call.1} parent=1 // pred_region
      %431 = dma.done [#allocation7], 16
    $region65: #{tpu_custom_call.1} parent=1 // pred_fallthru
      _
    // Predicated region
    $region66: #{tpu_custom_call.1} parent=1 // pred_check
      _
    $region67: #{tpu_custom_call.1} parent=1 // pred_check_branch
      %433 = sbr.rel (0) target = $region69
    $region68: #{tpu_custom_call.1} parent=1 // pred_region
      %434 = dma.done [#allocation12], 16
    $region69: #{tpu_custom_call.1} parent=1 // pred_fallthru
      _
    // Predicated region
    $region70: #{tpu_custom_call.1} parent=1 // pred_check
      _
    $region71: #{tpu_custom_call.1} parent=1 // pred_check_branch
      %436 = sbr.rel (0) target = $region73
    $region72: #{tpu_custom_call.1} parent=1 // pred_region
      %437 = dma.done [#allocation12], 16
    $region73: #{tpu_custom_call.1} parent=1 // pred_fallthru
      _
    %438 = vsyncpa [#allocation6], 1
    %439 = vsyncpa [#allocation9], 1
    %440 = vsyncpa [#allocation7], 1
    %441 = vsyncpa [#allocation12], 1

</llo_original>
